<compile_context>
chip_gen: v7x
topology: tpu7x:2x2x1
jax: 0.10.0
libtpu: 0.0.40
codegen_flags: <defaults>
</compile_context>

<pallas_src>
import jax
import jax.numpy as jnp
from jax.experimental import pallas as pl
from jax.experimental.pallas import tpu as pltpu

# ----------------------------- config ---------------------------------------
SIGMA_DATA = 0.5            # DenoiserConfig.sigma_data
SIGMA_OFFSET_NOISE = 0.3    # DenoiserConfig.sigma_offset_noise
SIGMA_LOC = -0.4            # SigmaDistributionConfig.loc
SIGMA_SCALE = 1.2           # SigmaDistributionConfig.scale
SIGMA_MIN = 2e-3            # SigmaDistributionConfig.sigma_min
SIGMA_MAX = 20.0            # SigmaDistributionConfig.sigma_max

NUM_STEPS_COND = 2          # inner_model.num_steps_conditioning (n)
IMG_C = 8                   # image channels
H = W = 16
HW = H * W
NUM_ACTIONS = 5


# ------------------------------ kernel --------------------------------------
def _denoiser_seq_kernel(cond0_ref, nextf_ref, noise_ref, aux_ref,
                         w1_ref, w2_ref, loss_ref, obs_buf_ref):
    """One grid step == one training sequence step.

    cond0_ref  : (n*C, B*HW)   first n frames (resident, DMA'd once)
    nextf_ref  : (C,   B*HW)   original frame n+s (target / to-be-noised)
    noise_ref  : (C,   B*HW)   sigma_offset*off + sigma*randn (pre-folded)
    aux_ref    : (C+8, B*HW)   rows 0..C-1: c_noise*Wn + bn + action bias;
                               then c_in, c_skip, c_out, 1/c_out, loss weight
    w1_ref     : (C, C)        inner-model weight on the noisy input
    w2_ref     : (C, n*C)      inner-model weight on conditioning (/sigma_data folded in)
    loss_ref   : (1, B*HW)     resident lane-dense loss accumulator (output)
    obs_buf_ref: (T*C, B*HW)   resident all_obs working buffer (VMEM scratch)
    """
    C = IMG_C
    CN = NUM_STEPS_COND * IMG_C
    s = pl.program_id(0)

    # Step 0: load initial conditioning frames into the resident buffer and
    # zero the loss accumulator.
    @pl.when(s == 0)
    def _init():
        obs_buf_ref[0:CN, :] = cond0_ref[...]
        loss_ref[...] = jnp.zeros_like(loss_ref)

    aux = aux_ref[...]                          # (C+8, B*HW)
    bias     = aux[0:C, :]                      # c_noise*W_n + b_n + act bias
    c_in     = aux[C:C + 1, :]
    c_skip   = aux[C + 1:C + 2, :]
    c_out    = aux[C + 2:C + 3, :]
    inv_cout = aux[C + 3:C + 4, :]
    w_loss   = aux[C + 4:C + 5, :]              # mask / (cnt*C*HW*seq_len)

    next_obs = nextf_ref[...]                   # (C, B*HW)
    # apply_noise: additive term pre-folded wrapper-side.
    noisy = next_obs + noise_ref[...]

    # Conditioning window: frames s .. s+n-1 from the resident all_obs buffer
    # (frames >= n were produced by previous grid steps' denoising).
    row0 = pl.multiple_of(s * C, 8)
    cond = obs_buf_ref[pl.ds(row0, CN), :]      # (n*C, B*HW)

    # Inner model stand-in: 1x1 conv over [c_in*noisy ; obs/sigma_data]
    # + (c_noise, action) bias, tanh.  Two small MXU dots (no concat copy).
    # TODO(synk): InnerModel's UNet architecture/config is not provided; this
    # linear stand-in keeps the EDM preconditioning structure.
    h = (jnp.dot(w1_ref[...], noisy * c_in, preferred_element_type=jnp.float32)
         + jnp.dot(w2_ref[...], cond, preferred_element_type=jnp.float32))
    model_out = jnp.tanh(h + bias)              # (C, B*HW)

    # Masked MSE against the EDM target, accumulated lane-dense.
    target = (next_obs - c_skip * noisy) * inv_cout
    diff = model_out - target
    loss_ref[...] += jnp.sum(diff * diff, axis=0, keepdims=True) * w_loss

    # wrap_model_output: clamp(-1,1) + byte quantization back to [-1,1],
    # written into the resident buffer as frame n+s (used by later steps).
    d = c_skip * noisy + c_out * model_out
    d = jnp.clip(d, -1.0, 1.0)
    d = jnp.floor((d + 1.0) * 127.5) * (2.0 / 255.0) - 1.0   # .byte() == floor for x>=0
    drow = pl.multiple_of((s + NUM_STEPS_COND) * C, 8)
    obs_buf_ref[pl.ds(drow, C), :] = d


# ------------------------------ parameters -----------------------------------
def init_params(key):
    k1, k2, k3, k4, k5 = jax.random.split(key, 5)
    Cn = NUM_STEPS_COND * IMG_C
    return {
        "w1": 0.1 * jax.random.normal(k1, (IMG_C, IMG_C), jnp.float32),
        "w2": 0.1 * jax.random.normal(k2, (IMG_C, Cn), jnp.float32),
        "noise_w": 0.1 * jax.random.normal(k3, (IMG_C,), jnp.float32),
        "noise_b": 0.1 * jax.random.normal(k4, (IMG_C,), jnp.float32),
        "act_emb": 0.1 * jax.random.normal(k5, (NUM_ACTIONS, IMG_C), jnp.float32),
    }


# ----------------- shared per-(step,batch) precompute (plain JAX) ------------
def _precompute(params, obs_seq, act_seq, mask_padding, key):
    B, T = obs_seq.shape[:2]
    C, n = IMG_C, NUM_STEPS_COND
    S = T - n

    k_sig, k_off, k_eps = jax.random.split(key, 3)

    # sample_sigma_training: exp(randn*scale + loc).clip(min, max)
    sigma = jnp.clip(
        jnp.exp(jax.random.normal(k_sig, (S, B), jnp.float32) * SIGMA_SCALE + SIGMA_LOC),
        SIGMA_MIN, SIGMA_MAX)                                       # (S, B)
    off = jax.random.normal(k_off, (S, B, C), jnp.float32)          # offset noise
    eps = jax.random.normal(k_eps, (S, B, C, HW), jnp.float32)      # randn_like(x)
    noise_add = SIGMA_OFFSET_NOISE * off[..., None] + eps * sigma[:, :, None, None]

    # compute_conditioners
    s2 = sigma ** 2 + SIGMA_OFFSET_NOISE ** 2
    sig_eff = jnp.sqrt(s2)
    denom = s2 + SIGMA_DATA ** 2
    c_in = 1.0 / jnp.sqrt(denom)
    c_skip = SIGMA_DATA ** 2 / denom
    c_out = sig_eff * jnp.sqrt(c_skip)
    c_noise = jnp.log(sig_eff) * 0.25

    # Action conditioning (single-agent path): embed + mean over the window.
    # TODO(synk): multiagent action-masking branch (act.ndim > 2) not implemented.
    win = jnp.arange(S)[:, None] + jnp.arange(n)[None, :]           # (S, n)
    act_bias = params["act_emb"][act_seq[:, win]].mean(axis=2)      # (B, S, C)
    act_bias = jnp.transpose(act_bias, (1, 0, 2))                   # (S, B, C)
    bias = (c_noise[:, :, None] * params["noise_w"][None, None, :]
            + params["noise_b"][None, None, :] + act_bias)          # (S, B, C)

    # Masked-mean loss weights: F.mse_loss(out[mask], target[mask]) per step,
    # averaged over seq_length (cnt guarded against padding-only steps).
    mask = mask_padding[:, n:].astype(jnp.float32).T                # (S, B)
    cnt = jnp.maximum(jnp.sum(mask, axis=1, keepdims=True), 1.0)
    w_loss = mask / (cnt * float(C * HW * S))                       # (S, B)

    return noise_add, bias, c_in, c_skip, c_out, w_loss


# ------------------------------ Denoiser.forward ------------------------------
def denoiser_forward(params, obs_seq, act_seq, mask_padding, key):
    """obs_seq: (B, T, C, H, W) f32; act_seq: (B, T) int32; mask_padding: (B, T) bool."""
    B, T = obs_seq.shape[:2]
    C, n = IMG_C, NUM_STEPS_COND
    S = T - n                      # seq_length (number of training steps)
    BHW = B * HW
    CN = n * C
    CAUX = C + 8

    noise_add, bias, c_in, c_skip, c_out, w_loss = _precompute(
        params, obs_seq, act_seq, mask_padding, key)

    # ---- lane folding: image layout (channels, B*HW), lane = b*HW + hw ----
    def fold_sb(x):   # (S, B) -> (S, 1, B*HW)
        return jnp.broadcast_to(x[:, :, None], (S, B, HW)).reshape(S, 1, BHW)

    bias_lane = jnp.broadcast_to(
        jnp.transpose(bias, (0, 2, 1))[:, :, :, None],
        (S, C, B, HW)).reshape(S, C, BHW)                           # (S, C, B*HW)

    aux = jnp.concatenate(
        [bias_lane, fold_sb(c_in), fold_sb(c_skip), fold_sb(c_out),
         fold_sb(1.0 / c_out), fold_sb(w_loss),
         jnp.zeros((S, 3, BHW), jnp.float32)], axis=1)              # (S, C+8, B*HW)
    aux = aux.reshape(S * CAUX, BHW)

    # apply_noise additive term, lane-folded: (S*C, B*HW)
    noise_lane = jnp.transpose(noise_add, (0, 2, 1, 3)).reshape(S * C, BHW)

    # observations, lane-folded: (T*C, B*HW)
    obs_lane = jnp.transpose(obs_seq.reshape(B, T, C, HW), (1, 2, 0, 3)).reshape(T * C, BHW)

    # Fold the constant 1/sigma_data rescale into the (tiny, resident) weight.
    w2_scaled = params["w2"] * (1.0 / SIGMA_DATA)

    loss_vec = pl.pallas_call(
        _denoiser_seq_kernel,
        out_shape=jax.ShapeDtypeStruct((1, BHW), jnp.float32),
        grid=(S,),
        in_specs=[
            pl.BlockSpec((CN, BHW), lambda s: (0, 0)),                    # first n frames (resident)
            pl.BlockSpec((C, BHW), lambda s: (s + NUM_STEPS_COND, 0)),    # next_obs frame n+s
            pl.BlockSpec((C, BHW), lambda s: (s, 0)),                     # additive noise
            pl.BlockSpec((CAUX, BHW), lambda s: (s, 0)),                  # aux slab (bias + coeffs)
            pl.BlockSpec((C, C), lambda s: (0, 0)),                       # W1 (resident)
            pl.BlockSpec((C, CN), lambda s: (0, 0)),                      # W2/sigma_data (resident)
        ],
        out_specs=pl.BlockSpec((1, BHW), lambda s: (0, 0)),               # lane-dense loss acc
        scratch_shapes=[pltpu.VMEM((T * C, BHW), jnp.float32)],           # resident all_obs
        compiler_params=pltpu.CompilerParams(
            # sequence axis is inherently sequential (step s+1 conditions on
            # the frame denoised at step s); batch is folded into lanes, so
            # there is no independent axis to mark "parallel".
            dimension_semantics=("arbitrary",)),
    )(obs_lane, obs_lane, noise_lane, aux, params["w1"], w2_scaled)

    loss = jnp.sum(loss_vec)
    return loss, {"loss_denoising": loss}


# ---------------------- pure-JAX reference (same semantics) ------------------
def denoiser_forward_ref(params, obs_seq, act_seq, mask_padding, key):
    B, T = obs_seq.shape[:2]
    C, n = IMG_C, NUM_STEPS_COND
    S = T - n
    noise_add, bias, c_in, c_skip, c_out, w_loss = _precompute(
        params, obs_seq, act_seq, mask_padding, key)

    all_obs = obs_seq.reshape(B, T, C, HW)
    w2s = params["w2"] * (1.0 / SIGMA_DATA)
    loss = jnp.float32(0.0)
    for s in range(S):
        obs_win = all_obs[:, s:s + n].reshape(B, n * C, HW)
        next_obs = all_obs[:, n + s]                                 # (B, C, HW)
        ci, csk, co = (c_in[s][:, None, None], c_skip[s][:, None, None],
                       c_out[s][:, None, None])
        noisy = next_obs + noise_add[s]
        h = (jnp.einsum('oc,bcl->bol', params["w1"], noisy * ci)
             + jnp.einsum('oc,bcl->bol', w2s, obs_win))
        model_out = jnp.tanh(h + bias[s][:, :, None])
        target = (next_obs - csk * noisy) / co
        diff = model_out - target
        loss = loss + jnp.sum(diff * diff * w_loss[s][:, None, None])
        d = jnp.clip(csk * noisy + co * model_out, -1.0, 1.0)
        d = jnp.floor((d + 1.0) * 127.5) * (2.0 / 255.0) - 1.0
        all_obs = all_obs.at[:, n + s].set(d)
    return loss


# --------------------------------- main --------------------------------------
if __name__ == "__main__":
    key = jax.random.PRNGKey(0)
    kp, ko, ka, kf = jax.random.split(key, 4)
    params = init_params(kp)

    B = 2
    T = NUM_STEPS_COND + 2                                # two training steps
    obs_seq = jax.random.uniform(ko, (B, T, IMG_C, H, W), jnp.float32, -1.0, 1.0)
    act_seq = jax.random.randint(ka, (B, T), 0, NUM_ACTIONS)
    mask_padding = jnp.ones((B, T), dtype=bool)

    loss, logs = jax.jit(denoiser_forward)(params, obs_seq, act_seq, mask_padding, kf)
    jax.block_until_ready(loss)
    loss_ref = jax.jit(denoiser_forward_ref)(params, obs_seq, act_seq, mask_padding, kf)
    jax.block_until_ready(loss_ref)

    assert jnp.isfinite(loss)
    assert jnp.allclose(loss, loss_ref, rtol=2e-2, atol=1e-5), (loss, loss_ref)
    print("KERNEL_OK")
</pallas_src>

<mosaic_0001>
module attributes {stable_mosaic.version = 11 : i64} {
  func.func @_denoiser_seq_kernel(%arg0: i32, %arg1: memref<16x512xf32, #tpu.memory_space<vmem>>, %arg2: memref<8x512xf32, #tpu.memory_space<vmem>>, %arg3: memref<8x512xf32, #tpu.memory_space<vmem>>, %arg4: memref<16x512xf32, #tpu.memory_space<vmem>>, %arg5: memref<8x8xf32, #tpu.memory_space<vmem>>, %arg6: memref<8x16xf32, #tpu.memory_space<vmem>>, %arg7: memref<1x512xf32, #tpu.memory_space<vmem>>, %arg8: memref<32x512xf32, #tpu.memory_space<vmem>>) attributes {dimension_semantics = [#tpu.dimension_semantics<arbitrary>], iteration_bounds = array<i64: 2>, scalar_prefetch = 0 : i64, scratch_operands = 1 : i64, tpu.core_type = #tpu.core_type<tc>, window_params = [{transform_indices = @transform_0, window_bounds = array<i64: 16, 512>}, {transform_indices = @transform_1, window_bounds = array<i64: 8, 512>}, {transform_indices = @transform_2, window_bounds = array<i64: 8, 512>}, {transform_indices = @transform_3, window_bounds = array<i64: 16, 512>}, {pipeline_mode = #tpu.pipeline_mode<synchronous>, transform_indices = @transform_4, window_bounds = array<i64: 8, 8>}, {pipeline_mode = #tpu.pipeline_mode<synchronous>, transform_indices = @transform_5, window_bounds = array<i64: 8, 16>}, {pipeline_mode = #tpu.pipeline_mode<synchronous>, transform_indices = @transform_6, window_bounds = array<i64: 1, 512>}]} {
    %c0_i32 = arith.constant 0 : i32
    %0 = arith.cmpi eq, %arg0, %c0_i32 : i32
    %1 = arith.extui %0 : i1 to i32
    %c0_i32_0 = arith.constant 0 : i32
    %2 = arith.cmpi ne, %1, %c0_i32_0 : i32
    scf.if %2 {
      %c0_25 = arith.constant 0 : index
      %c0_26 = arith.constant 0 : index
      %62 = vector.load %arg1[%c0_25, %c0_26] : memref<16x512xf32, #tpu.memory_space<vmem>>, vector<16x512xf32>
      %c0_27 = arith.constant 0 : index
      %c0_28 = arith.constant 0 : index
      %63 = vector.load %arg8[%c0_27, %c0_28] : memref<32x512xf32, #tpu.memory_space<vmem>>, vector<16x512xf32>
      tpu.vector_store %arg8[%c0_27, %c0_28], %62 {strides = array<i32>} : memref<32x512xf32, #tpu.memory_space<vmem>>, vector<16x512xf32>,
      %cst_29 = arith.constant 0.000000e+00 : f32
      %64 = vector.broadcast %cst_29 : f32 to vector<1x512xf32>
      %c0_30 = arith.constant 0 : index
      %c0_31 = arith.constant 0 : index
      %65 = vector.load %arg7[%c0_30, %c0_31] : memref<1x512xf32, #tpu.memory_space<vmem>>, vector<1x512xf32>
      tpu.vector_store %arg7[%c0_30, %c0_31], %64 {strides = array<i32>} : memref<1x512xf32, #tpu.memory_space<vmem>>, vector<1x512xf32>,
    } else {
    }
    %c0 = arith.constant 0 : index
    %c0_1 = arith.constant 0 : index
    %3 = vector.load %arg4[%c0, %c0_1] : memref<16x512xf32, #tpu.memory_space<vmem>>, vector<16x512xf32>
    %4 = vector.extract_strided_slice %3 {offsets = [0, 0], sizes = [8, 512], strides = [1, 1]} : vector<16x512xf32> to vector<8x512xf32>
    %5 = vector.extract_strided_slice %3 {offsets = [8, 0], sizes = [1, 512], strides = [1, 1]} : vector<16x512xf32> to vector<1x512xf32>
    %6 = vector.extract_strided_slice %3 {offsets = [9, 0], sizes = [1, 512], strides = [1, 1]} : vector<16x512xf32> to vector<1x512xf32>
    %7 = vector.extract_strided_slice %3 {offsets = [10, 0], sizes = [1, 512], strides = [1, 1]} : vector<16x512xf32> to vector<1x512xf32>
    %8 = vector.extract_strided_slice %3 {offsets = [11, 0], sizes = [1, 512], strides = [1, 1]} : vector<16x512xf32> to vector<1x512xf32>
    %9 = vector.extract_strided_slice %3 {offsets = [12, 0], sizes = [1, 512], strides = [1, 1]} : vector<16x512xf32> to vector<1x512xf32>
    %c0_2 = arith.constant 0 : index
    %c0_3 = arith.constant 0 : index
    %10 = vector.load %arg2[%c0_2, %c0_3] : memref<8x512xf32, #tpu.memory_space<vmem>>, vector<8x512xf32>
    %c0_4 = arith.constant 0 : index
    %c0_5 = arith.constant 0 : index
    %11 = vector.load %arg3[%c0_4, %c0_5] : memref<8x512xf32, #tpu.memory_space<vmem>>, vector<8x512xf32>
    %12 = arith.addf %10, %11 : vector<8x512xf32>
    %c8_i32 = arith.constant 8 : i32
    %13 = arith.muli %arg0, %c8_i32 : i32
    %14 = tpu.assume_multiple %13, 8 : i32
    %15 = arith.index_cast %14 : i32 to index
    %c0_6 = arith.constant 0 : index
    %16 = vector.load %arg8[%15, %c0_6] : memref<32x512xf32, #tpu.memory_space<vmem>>, vector<16x512xf32>
    %c0_7 = arith.constant 0 : index
    %c0_8 = arith.constant 0 : index
    %17 = vector.load %arg5[%c0_7, %c0_8] : memref<8x8xf32, #tpu.memory_space<vmem>>, vector<8x8xf32>
    %18 = vector.broadcast %5 : vector<1x512xf32> to vector<8x512xf32>
    %19 = arith.mulf %12, %18 : vector<8x512xf32>
    %cst = arith.constant dense<0.000000e+00> : vector<8x512xf32>
    %20 = tpu.matmul %17, %19, %cst {dimension_numbers = #tpu.dot_dimension_numbers<[1], [0], [0], [1], [0, 0, 1, 1], [], []>} : vector<8x8xf32>, vector<8x512xf32>, vector<8x512xf32> -> vector<8x512xf32>
    %c0_9 = arith.constant 0 : index
    %c0_10 = arith.constant 0 : index
    %21 = vector.load %arg6[%c0_9, %c0_10] : memref<8x16xf32, #tpu.memory_space<vmem>>, vector<8x16xf32>
    %cst_11 = arith.constant dense<0.000000e+00> : vector<8x512xf32>
    %22 = tpu.matmul %21, %16, %cst_11 {dimension_numbers = #tpu.dot_dimension_numbers<[1], [0], [0], [1], [0, 0, 1, 1], [], []>} : vector<8x16xf32>, vector<16x512xf32>, vector<8x512xf32> -> vector<8x512xf32>
    %23 = arith.addf %20, %22 : vector<8x512xf32>
    %24 = arith.addf %23, %4 : vector<8x512xf32>
    %25 = math.tanh %24 : vector<8x512xf32>
    %26 = vector.broadcast %6 : vector<1x512xf32> to vector<8x512xf32>
    %27 = arith.mulf %26, %12 : vector<8x512xf32>
    %28 = arith.subf %10, %27 : vector<8x512xf32>
    %29 = vector.broadcast %8 : vector<1x512xf32> to vector<8x512xf32>
    %30 = arith.mulf %28, %29 : vector<8x512xf32>
    %31 = arith.subf %25, %30 : vector<8x512xf32>
    %c0_12 = arith.constant 0 : index
    %c0_13 = arith.constant 0 : index
    %32 = vector.load %arg7[%c0_12, %c0_13] : memref<1x512xf32, #tpu.memory_space<vmem>>, vector<1x512xf32>
    %33 = arith.mulf %31, %31 : vector<8x512xf32>
    %cst_14 = arith.constant dense<0.000000e+00> : vector<512xf32>
    %34 = vector.multi_reduction <add>, %33, %cst_14 [0] : vector<8x512xf32> to vector<512xf32>
    %35 = vector.shape_cast %34 : vector<512xf32> to vector<1x512xf32>
    %36 = arith.mulf %35, %9 : vector<1x512xf32>
    %37 = arith.addf %32, %36 : vector<1x512xf32>
    %c0_15 = arith.constant 0 : index
    %c0_16 = arith.constant 0 : index
    %38 = vector.load %arg7[%c0_15, %c0_16] : memref<1x512xf32, #tpu.memory_space<vmem>>, vector<1x512xf32>
    tpu.vector_store %arg7[%c0_15, %c0_16], %37 {strides = array<i32>} : memref<1x512xf32, #tpu.memory_space<vmem>>, vector<1x512xf32>,
    %39 = vector.broadcast %6 : vector<1x512xf32> to vector<8x512xf32>
    %40 = arith.mulf %39, %12 : vector<8x512xf32>
    %41 = vector.broadcast %7 : vector<1x512xf32> to vector<8x512xf32>
    %42 = arith.mulf %41, %25 : vector<8x512xf32>
    %43 = arith.addf %40, %42 : vector<8x512xf32>
    %cst_17 = arith.constant -1.000000e+00 : f32
    %cst_18 = arith.constant 1.000000e+00 : f32
    %44 = vector.broadcast %cst_17 : f32 to vector<8x512xf32>
    %45 = arith.maximumf %44, %43 : vector<8x512xf32>
    %46 = vector.broadcast %cst_18 : f32 to vector<8x512xf32>
    %47 = arith.minimumf %46, %45 : vector<8x512xf32>
    %cst_19 = arith.constant 1.000000e+00 : f32
    %48 = vector.broadcast %cst_19 : f32 to vector<8x512xf32>
    %49 = arith.addf %47, %48 : vector<8x512xf32>
    %cst_20 = arith.constant 1.275000e+02 : f32
    %50 = vector.broadcast %cst_20 : f32 to vector<8x512xf32>
    %51 = arith.mulf %49, %50 : vector<8x512xf32>
    %52 = math.floor %51 : vector<8x512xf32>
    %cst_21 = arith.constant 0.00784313772 : f32
    %53 = vector.broadcast %cst_21 : f32 to vector<8x512xf32>
    %54 = arith.mulf %52, %53 : vector<8x512xf32>
    %cst_22 = arith.constant 1.000000e+00 : f32
    %55 = vector.broadcast %cst_22 : f32 to vector<8x512xf32>
    %56 = arith.subf %54, %55 : vector<8x512xf32>
    %c2_i32 = arith.constant 2 : i32
    %57 = arith.addi %arg0, %c2_i32 : i32
    %c8_i32_23 = arith.constant 8 : i32
    %58 = arith.muli %57, %c8_i32_23 : i32
    %59 = tpu.assume_multiple %58, 8 : i32
    %60 = arith.index_cast %59 : i32 to index
    %c0_24 = arith.constant 0 : index
    %61 = vector.load %arg8[%60, %c0_24] : memref<32x512xf32, #tpu.memory_space<vmem>>, vector<8x512xf32>
    tpu.vector_store %arg8[%60, %c0_24], %56 {strides = array<i32>} : memref<32x512xf32, #tpu.memory_space<vmem>>, vector<8x512xf32>,
    return
  }
  func.func @transform_0(%arg0: i32) -> (i32, i32) {
    %c0_i32 = arith.constant 0 : i32
    %c0_i32_0 = arith.constant 0 : i32
    %c0_i32_1 = arith.constant 0 : i32
    return %c0_i32, %c0_i32_0 : i32, i32
  }
  func.func @transform_1(%arg0: i32) -> (i32, i32) {
    %c2_i32 = arith.constant 2 : i32
    %0 = arith.addi %arg0, %c2_i32 : i32
    %c0_i32 = arith.constant 0 : i32
    %c0_i32_0 = arith.constant 0 : i32
    return %0, %c0_i32 : i32, i32
  }
  func.func @transform_2(%arg0: i32) -> (i32, i32) {
    %c0_i32 = arith.constant 0 : i32
    %c0_i32_0 = arith.constant 0 : i32
    return %arg0, %c0_i32 : i32, i32
  }
  func.func @transform_3(%arg0: i32) -> (i32, i32) {
    %c0_i32 = arith.constant 0 : i32
    %c0_i32_0 = arith.constant 0 : i32
    return %arg0, %c0_i32 : i32, i32
  }
  func.func @transform_4(%arg0: i32) -> (i32, i32) {
    %c0_i32 = arith.constant 0 : i32
    %c0_i32_0 = arith.constant 0 : i32
    %c0_i32_1 = arith.constant 0 : i32
    return %c0_i32, %c0_i32_0 : i32, i32
  }
  func.func @transform_5(%arg0: i32) -> (i32, i32) {
    %c0_i32 = arith.constant 0 : i32
    %c0_i32_0 = arith.constant 0 : i32
    %c0_i32_1 = arith.constant 0 : i32
    return %c0_i32, %c0_i32_0 : i32, i32
  }
  func.func @transform_6(%arg0: i32) -> (i32, i32) {
    %c0_i32 = arith.constant 0 : i32
    %c0_i32_0 = arith.constant 0 : i32
    %c0_i32_1 = arith.constant 0 : i32
    return %c0_i32, %c0_i32_0 : i32, i32
  }
}

</mosaic_0001>

<llo_original>
// kernel: denoiser_forward.1
$region0: #{denoiser_forward.1}
  #allocation0 [shape = 'u32[]', space=smem, size = 0x4, offset = 0x4, fixed_abs, tag = 'smem constant byte address 0x4 - core index']
  #allocation1 [shape = 'u32[144,128]{1,0:T(1,128)}', space=vmem, size = 0x12000, scoped, tag = 'internal scratch']
  #allocation2 [shape = 'f32[32,512]{1,0:T(8,128)}', space=vmem, size = 0x10000, scoped, tag = 'scratch operand']
  %s0 = inlined_call_operand.vmem [shape: f32[32,512], index: 0, kind: input, shape index: {}, may-alias: {0,1}]
  %s1 = inlined_call_operand.vmem [shape: f32[32,512], index: 1, kind: input, shape index: {}, may-alias: {0,1}]
  %s2 = inlined_call_operand.vmem [shape: f32[16,512], index: 2, kind: input, shape index: {}]
  %s3 = inlined_call_operand.vmem [shape: f32[32,512], index: 3, kind: input, shape index: {}]
  %s4 = inlined_call_operand.vmem [shape: f32[8,8], index: 4, kind: input, shape index: {}]
  %s5 = inlined_call_operand.vmem [shape: f32[8,16], index: 5, kind: input, shape index: {}]
  %s6 = inlined_call_operand.vmem [shape: f32[1,512], index: 6, kind: output, shape index: {}]
  %s7 = sld [smem:[#allocation0]]
  $region61: #{denoiser_forward.1} parent=0
    _
  %s9 = ssub.s32 1, %s7
  %s10 = scalar_select 0, %s9, %s7
  loop: start=0, step=1, limit=4
  $region2: #{denoiser_forward.1} parent=0 // loop_pre_header
    _
  $region3: #{denoiser_forward.1} parent=0 // loop_header
    %s12 = sphi 0, %s16
    %p13 = scmp.ge.s32.totalorder %s12, 4
    %s20 = sphi 0, %s20
    %s22 = sphi 0, %s20
    %s23 = sphi 0, %s22
    %s37 = sphi 0, %s23
    %s45 = sphi 0, %s47
    %s48 = sphi 0, %s45
    %s49 = sphi 0, %s48
    %s65 = sphi 0, %s49
    %s71 = sphi 0, %s73
    %s74 = sphi 0, %s71
    %s75 = sphi 0, %s74
    %s91 = sphi 0, %s75
    %s97 = sphi 0, %s99
    %s100 = sphi 0, %s97
    %s101 = sphi 0, %s100
    %s117 = sphi 0, %s101
    %s121 = sphi 0, %s121
    %s123 = sphi 0, %s121
    %s124 = sphi 0, %s123
    %s138 = sphi 0, %s124
    %s142 = sphi 0, %s142
    %s144 = sphi 0, %s142
    %s145 = sphi 0, %s144
    %s159 = sphi 0, %s145
    %s163 = sphi 0, %s163
    %s165 = sphi 0, %s163
    %s166 = sphi 0, %s165
    %s180 = sphi 0, %s166
  $region4: #{denoiser_forward.1} parent=0 // loop_header_branch
    %15 = sbr.rel (%p13) target = $region8
  $region5: #{denoiser_forward.1} parent=0 // loop_body
    %s17 = ssub.s32 %s12, 1
    %s18 = ssub.s32 %s12, 2
    %s19 = sadd.s32 %s12, 1
    %s21 = sadd.s32 %s20, 1
    %p24 = scmp.eq.s32.totalorder %s12, 1
    %p25 = scmp.ne.s32.totalorder %s20, %s22
    %p26 = scmp.eq.s32.totalorder %s12, 0
    %p27 = por %p25, %p26
    %p28 = scmp.ne.s32.totalorder %s20, %s22
    %p29 = scmp.eq.s32.totalorder %s17, 1
    %p30 = por %p28, %p29
    %p31 = scmp.ne.s32.totalorder %s22, %s23
    %p32 = scmp.eq.s32.totalorder %s17, 0
    %p33 = por %p31, %p32
    %p34 = scmp.ne.s32.totalorder %s22, %s23
    %p35 = scmp.eq.s32.totalorder %s18, 1
    %p36 = por %p34, %p35
    %p38 = scmp.ne.s32.totalorder %s23, %s37
    %p39 = scmp.eq.s32.totalorder %s18, 0
    %p40 = por %p38, %p39
    %s41 = sadd.s32 %s12, 2
    %s42 = sadd.s32 %s19, 2
    %s43 = ssub.s32 %s41, %s42
    %p44 = scmp.eq.s32.totalorder %s43, 0
    %s46 = sadd.s32 %s45, 1
    %s47 = scalar_select %p44, %s45, %s46
    %p50 = pneg %p44
    %p51 = scmp.eq.s32.totalorder %s12, 1
    %p52 = por %p50, %p51
    %p53 = scmp.ne.s32.totalorder %s45, %s48
    %p54 = scmp.eq.s32.totalorder %s12, 0
    %p55 = por %p53, %p54
    %p56 = scmp.ne.s32.totalorder %s45, %s48
    %p57 = scmp.eq.s32.totalorder %s17, 1
    %p58 = por %p56, %p57
    %p59 = scmp.ne.s32.totalorder %s48, %s49
    %p60 = scmp.eq.s32.totalorder %s17, 0
    %p61 = por %p59, %p60
    %p62 = scmp.ne.s32.totalorder %s48, %s49
    %p63 = scmp.eq.s32.totalorder %s18, 1
    %p64 = por %p62, %p63
    %p66 = scmp.ne.s32.totalorder %s49, %s65
    %p67 = scmp.eq.s32.totalorder %s18, 0
    %p68 = por %p66, %p67
    %s69 = ssub.s32 %s12, %s19
    %p70 = scmp.eq.s32.totalorder %s69, 0
    %s72 = sadd.s32 %s71, 1
    %s73 = scalar_select %p70, %s71, %s72
    %p76 = pneg %p70
    %p77 = scmp.eq.s32.totalorder %s12, 1
    %p78 = por %p76, %p77
    %p79 = scmp.ne.s32.totalorder %s71, %s74
    %p80 = scmp.eq.s32.totalorder %s12, 0
    %p81 = por %p79, %p80
    %p82 = scmp.ne.s32.totalorder %s71, %s74
    %p83 = scmp.eq.s32.totalorder %s17, 1
    %p84 = por %p82, %p83
    %p85 = scmp.ne.s32.totalorder %s74, %s75
    %p86 = scmp.eq.s32.totalorder %s17, 0
    %p87 = por %p85, %p86
    %p88 = scmp.ne.s32.totalorder %s74, %s75
    %p89 = scmp.eq.s32.totalorder %s18, 1
    %p90 = por %p88, %p89
    %p92 = scmp.ne.s32.totalorder %s75, %s91
    %p93 = scmp.eq.s32.totalorder %s18, 0
    %p94 = por %p92, %p93
    %s95 = ssub.s32 %s12, %s19
    %p96 = scmp.eq.s32.totalorder %s95, 0
    %s98 = sadd.s32 %s97, 1
    %s99 = scalar_select %p96, %s97, %s98
    %p102 = pneg %p96
    %p103 = scmp.eq.s32.totalorder %s12, 1
    %p104 = por %p102, %p103
    %p105 = scmp.ne.s32.totalorder %s97, %s100
    %p106 = scmp.eq.s32.totalorder %s12, 0
    %p107 = por %p105, %p106
    %p108 = scmp.ne.s32.totalorder %s97, %s100
    %p109 = scmp.eq.s32.totalorder %s17, 1
    %p110 = por %p108, %p109
    %p111 = scmp.ne.s32.totalorder %s100, %s101
    %p112 = scmp.eq.s32.totalorder %s17, 0
    %p113 = por %p111, %p112
    %p114 = scmp.ne.s32.totalorder %s100, %s101
    %p115 = scmp.eq.s32.totalorder %s18, 1
    %p116 = por %p114, %p115
    %p118 = scmp.ne.s32.totalorder %s101, %s117
    %p119 = scmp.eq.s32.totalorder %s18, 0
    %p120 = por %p118, %p119
    %s122 = sadd.s32 %s121, 1
    %p125 = scmp.eq.s32.totalorder %s12, 1
    %p126 = scmp.ne.s32.totalorder %s121, %s123
    %p127 = scmp.eq.s32.totalorder %s12, 0
    %p128 = por %p126, %p127
    %p129 = scmp.ne.s32.totalorder %s121, %s123
    %p130 = scmp.eq.s32.totalorder %s17, 1
    %p131 = por %p129, %p130
    %p132 = scmp.ne.s32.totalorder %s123, %s124
    %p133 = scmp.eq.s32.totalorder %s17, 0
    %p134 = por %p132, %p133
    %p135 = scmp.ne.s32.totalorder %s123, %s124
    %p136 = scmp.eq.s32.totalorder %s18, 1
    %p137 = por %p135, %p136
    %p139 = scmp.ne.s32.totalorder %s124, %s138
    %p140 = scmp.eq.s32.totalorder %s18, 0
    %p141 = por %p139, %p140
    %s143 = sadd.s32 %s142, 1
    %p146 = scmp.eq.s32.totalorder %s12, 1
    %p147 = scmp.ne.s32.totalorder %s142, %s144
    %p148 = scmp.eq.s32.totalorder %s12, 0
    %p149 = por %p147, %p148
    %p150 = scmp.ne.s32.totalorder %s142, %s144
    %p151 = scmp.eq.s32.totalorder %s17, 1
    %p152 = por %p150, %p151
    %p153 = scmp.ne.s32.totalorder %s144, %s145
    %p154 = scmp.eq.s32.totalorder %s17, 0
    %p155 = por %p153, %p154
    %p156 = scmp.ne.s32.totalorder %s144, %s145
    %p157 = scmp.eq.s32.totalorder %s18, 1
    %p158 = por %p156, %p157
    %p160 = scmp.ne.s32.totalorder %s145, %s159
    %p161 = scmp.eq.s32.totalorder %s18, 0
    %p162 = por %p160, %p161
    %s164 = sadd.s32 %s163, 1
    %p167 = scmp.eq.s32.totalorder %s12, 1
    %p168 = scmp.ne.s32.totalorder %s163, %s165
    %p169 = scmp.eq.s32.totalorder %s12, 0
    %p170 = por %p168, %p169
    %p171 = scmp.ne.s32.totalorder %s163, %s165
    %p172 = scmp.eq.s32.totalorder %s17, 1
    %p173 = por %p171, %p172
    %p174 = scmp.ne.s32.totalorder %s165, %s166
    %p175 = scmp.eq.s32.totalorder %s17, 0
    %p176 = por %p174, %p175
    %p177 = scmp.ne.s32.totalorder %s165, %s166
    %p178 = scmp.eq.s32.totalorder %s18, 1
    %p179 = por %p177, %p178
    %p181 = scmp.ne.s32.totalorder %s166, %s180
    %p182 = scmp.eq.s32.totalorder %s18, 0
    %p183 = por %p181, %p182
    %p184 = scmp.le.s32.totalorder 1, %s12
    %p185 = scmp.lt.s32.totalorder %s12, 3
    %p186 = pnand %p184, %p185
    %p187 = pneg %p186
    // Predicated region
    $region9: #{denoiser_forward.1} parent=5 // pred_check
      _
    $region10: #{denoiser_forward.1} parent=5 // pred_check_branch
      %189 = sbr.rel (%p186) target = $region12
    $region11: #{denoiser_forward.1} parent=5 // pred_region
      %s190 = ssub.s32 %s12, 1
      // Predicated region
      $region13: #{denoiser_forward.1} parent=11 // pred_check
        %p191 = pneg %p33
      $region14: #{denoiser_forward.1} parent=11 // pred_check_branch
        %193 = sbr.rel (%p191) target = $region16
      $region15: #{denoiser_forward.1} parent=11 // pred_region
        _
      $region16: #{denoiser_forward.1} parent=11 // pred_fallthru
        _
      // Predicated region
      $region17: #{denoiser_forward.1} parent=11 // pred_check
        %p194 = pneg %p134
      $region18: #{denoiser_forward.1} parent=11 // pred_check_branch
        %196 = sbr.rel (%p194) target = $region20
      $region19: #{denoiser_forward.1} parent=11 // pred_region
        _
      $region20: #{denoiser_forward.1} parent=11 // pred_fallthru
        _
      // Predicated region
      $region21: #{denoiser_forward.1} parent=11 // pred_check
        %p197 = pneg %p155
      $region22: #{denoiser_forward.1} parent=11 // pred_check_branch
        %199 = sbr.rel (%p197) target = $region24
      $region23: #{denoiser_forward.1} parent=11 // pred_region
        _
      $region24: #{denoiser_forward.1} parent=11 // pred_fallthru
        _
    $region12: #{denoiser_forward.1} parent=5 // pred_fallthru
      _
    %p200 = scmp.lt.s32.totalorder %s12, 2
    // Predicated region
    $region25: #{denoiser_forward.1} parent=5 // pred_check
      %p201 = pneg %p200
    $region26: #{denoiser_forward.1} parent=5 // pred_check_branch
      %203 = sbr.rel (%p201) target = $region28
    $region27: #{denoiser_forward.1} parent=5 // pred_region
      // Predicated region
      $region29: #{denoiser_forward.1} parent=27 // pred_check
        %p204 = pneg %p55
      $region30: #{denoiser_forward.1} parent=27 // pred_check_branch
        %206 = sbr.rel (%p204) target = $region32
      $region31: #{denoiser_forward.1} parent=27 // pred_region
        %s207 = sadd.s32 %s12, 2
        %p208 = scmp.lt.s32.totalorder %s207, 3
        %s209 = scalar_select %p208, %s207, 3
        %s210 = smul.addr %s209, 4
        %s211 = smul.addr %s210, 8
        %s212 = scalar_lea.vmem %s1, %s211
        %s213 = sadd.s32 %s12, 2
      $region32: #{denoiser_forward.1} parent=27 // pred_fallthru
        _
      // Predicated region
      $region33: #{denoiser_forward.1} parent=27 // pred_check
        %p214 = pneg %p81
      $region34: #{denoiser_forward.1} parent=27 // pred_check_branch
        %216 = sbr.rel (%p214) target = $region36
      $region35: #{denoiser_forward.1} parent=27 // pred_region
        %p217 = scmp.lt.s32.totalorder %s12, 1
        %s218 = scalar_select %p217, %s12, 1
        %s219 = smul.addr %s218, 4
        %s220 = smul.addr %s219, 8
        %s221 = scalar_lea.vmem %s2, %s220
      $region36: #{denoiser_forward.1} parent=27 // pred_fallthru
        _
      // Predicated region
      $region37: #{denoiser_forward.1} parent=27 // pred_check
        %p222 = pneg %p107
      $region38: #{denoiser_forward.1} parent=27 // pred_check_branch
        %224 = sbr.rel (%p222) target = $region40
      $region39: #{denoiser_forward.1} parent=27 // pred_region
        %s225 = smul.u32 2, %s12
        %p226 = scmp.lt.s32.totalorder %s225, 3
        %s227 = scalar_select %p226, %s225, 3
        %s228 = smul.addr %s227, 4
        %s229 = smul.addr %s228, 8
        %s230 = scalar_lea.vmem %s3, %s229
        %s231 = smul.u32 2, %s12
      $region40: #{denoiser_forward.1} parent=27 // pred_fallthru
        _
    $region28: #{denoiser_forward.1} parent=5 // pred_fallthru
      _
    %p232 = scmp.le.s32.totalorder 1, %s12
    %p233 = scmp.lt.s32.totalorder %s12, 3
    %p234 = pnand %p232, %p233
    %p235 = pneg %p234
    // Predicated region
    $region41: #{denoiser_forward.1} parent=5 // pred_check
      _
    $region42: #{denoiser_forward.1} parent=5 // pred_check_branch
      %237 = sbr.rel (%p234) target = $region44
    $region43: #{denoiser_forward.1} parent=5 // pred_region
      %s238 = ssub.s32 %s12, 1
      %p239 = pneg %p33
      %p240 = pneg %p30
      %s241 = sadd.s32 %s17, 2
      %p242 = scmp.lt.s32.totalorder %s241, 3
      %s243 = scalar_select %p242, %s241, 3
      %s244 = smul.addr %s243, 4
      %s245 = smul.addr %s244, 8
      %s246 = scalar_lea.vmem %s1, %s245
      %p247 = pneg %p61
      %p248 = pneg %p58
      %p249 = scmp.lt.s32.totalorder %s17, 1
      %s250 = scalar_select %p249, %s17, 1
      %s251 = smul.addr %s250, 4
      %s252 = smul.addr %s251, 8
      %s253 = scalar_lea.vmem %s2, %s252
      %p254 = pneg %p87
      %p255 = pneg %p84
      %s256 = smul.u32 2, %s17
      %p257 = scmp.lt.s32.totalorder %s256, 3
      %s258 = scalar_select %p257, %s256, 3
      %s259 = smul.addr %s258, 4
      %s260 = smul.addr %s259, 8
      %s261 = scalar_lea.vmem %s3, %s260
      %p262 = pneg %p113
      %p263 = pneg %p110
      %p264 = pneg %p134
      %p265 = pneg %p131
      %p266 = pneg %p155
      %p267 = pneg %p152
      %p268 = pneg %p176
      %p269 = pneg %p173
      %s270 = sadd.s32 %s17, 2
      %p271 = scmp.lt.s32.totalorder %s270, 3
      %s272 = scalar_select %p271, %s270, 3
      %s273 = smul.addr %s272, 4
      %s274 = smul.addr %s273, 8
      %s275 = scalar_lea.vmem %s1, %s274
      %s276 = sadd.s32 %s17, 2
      %p277 = scmp.lt.s32.totalorder %s17, 1
      %s278 = scalar_select %p277, %s17, 1
      %s279 = smul.addr %s278, 4
      %s280 = smul.addr %s279, 8
      %s281 = scalar_lea.vmem %s2, %s280
      %s282 = smul.u32 2, %s17
      %p283 = scmp.lt.s32.totalorder %s282, 3
      %s284 = scalar_select %p283, %s282, 3
      %s285 = smul.addr %s284, 4
      %s286 = smul.addr %s285, 8
      %s287 = scalar_lea.vmem %s3, %s286
      %s288 = smul.u32 2, %s17
      %p289 = scmp.eq.s32.totalorder %s17, 0
      // Predicated region
      $region45: #{denoiser_forward.1} parent=43 // pred_check
        %p290 = pneg %p289
      $region46: #{denoiser_forward.1} parent=43 // pred_check_branch
        %292 = sbr.rel (%p290) target = $region48
      $region47: #{denoiser_forward.1} parent=43 // pred_region
        %v293 = vld [vmem:[%s0] sm:$0xff]
        %v294 = vld [vmem:[%s0 + $0x8] sm:$0xff]
        %v295 = vld [vmem:[%s0 + $0x10] sm:$0xff]
        %v296 = vld [vmem:[%s0 + $0x18] sm:$0xff]
        %v297 = vld [vmem:[%s0 + $0x20] sm:$0xff]
        %v298 = vld [vmem:[%s0 + $0x28] sm:$0xff]
        %v299 = vld [vmem:[%s0 + $0x30] sm:$0xff]
        %v300 = vld [vmem:[%s0 + $0x38] sm:$0xff]
        %301 = vst [vmem:[#allocation2] sm:$0xff] %v293
        %302 = vst [vmem:[#allocation2 + $0x8] sm:$0xff] %v294
        %303 = vst [vmem:[#allocation2 + $0x10] sm:$0xff] %v295
        %304 = vst [vmem:[#allocation2 + $0x18] sm:$0xff] %v296
        %305 = vst [vmem:[#allocation2 + $0x20] sm:$0xff] %v297
        %306 = vst [vmem:[#allocation2 + $0x28] sm:$0xff] %v298
        %307 = vst [vmem:[#allocation2 + $0x30] sm:$0xff] %v299
        %308 = vst [vmem:[#allocation2 + $0x38] sm:$0xff] %v300
        %v309 = vlaneseq
        %vm310 = vcmp.ge.s32.totalorder %v309, 0
        %vm311 = vcmp.lt.s32.totalorder %v309, 512
        %vm312 = vmand %vm310, %vm311
        %313 = vst.msk [vmem:[%s6] sm:$0xf] %vm312, 0.0
      $region48: #{denoiser_forward.1} parent=43 // pred_fallthru
        _
      %v314 = vld [vmem:[%s287] sm:$0xff]
      %v315 = vld [vmem:[%s287 + $0x8] sm:$0xff]
      %v316 = vld [vmem:[%s287 + $0x10] sm:$0xff]
      %v317 = vld [vmem:[%s287 + $0x18] sm:$0xff]
      %v318 = vld [vmem:[%s287 + $0x20] sm:$0xff]
      %v319 = vld [vmem:[%s287 + $0x28] sm:$0xff]
      %v320 = vld [vmem:[%s287 + $0x30] sm:$0xff]
      %v321 = vld [vmem:[%s287 + $0x38] sm:$0xff]
      %v322 = vld [vmem:[%s275] sm:$0xff]
      %v323 = vld [vmem:[%s275 + $0x8] sm:$0xff]
      %v324 = vld [vmem:[%s275 + $0x10] sm:$0xff]
      %v325 = vld [vmem:[%s275 + $0x18] sm:$0xff]
      %v326 = vld [vmem:[%s281] sm:$0xff]
      %v327 = vld [vmem:[%s281 + $0x8] sm:$0xff]
      %v328 = vld [vmem:[%s281 + $0x10] sm:$0xff]
      %v329 = vld [vmem:[%s281 + $0x18] sm:$0xff]
      %v330 = vadd.f32 %v322, %v326
      %v331 = vadd.f32 %v323, %v327
      %v332 = vadd.f32 %v324, %v328
      %v333 = vadd.f32 %v325, %v329
      %s334 = smul.u32 %s17, 8
      %s335 = sshra.s32 %s334, 3
      %s336 = sand.u32 %s334, 7
      %s337 = smul.u32 %s335, 4
      %s338 = smul.addr %s337, 8
      %s339 = scalar_lea.vmem [#allocation2], %s338
      %v340 = vld [vmem:[%s339] sm:$0xff]
      %v341 = vld [vmem:[%s339 + $0x8] sm:$0xff]
      %v342 = vld [vmem:[%s339 + $0x10] sm:$0xff]
      %v343 = vld [vmem:[%s339 + $0x18] sm:$0xff]
      %v344 = vld [vmem:[%s339 + $0x20] sm:$0xff]
      %v345 = vld [vmem:[%s339 + $0x28] sm:$0xff]
      %v346 = vld [vmem:[%s339 + $0x30] sm:$0xff]
      %v347 = vld [vmem:[%s339 + $0x38] sm:$0xff]
      %v348 = vld [vmem:[%s4] sm:$0xff]
      %v349 = vlaneseq
      %v350 = vshrl.u32 %v349, 7
      %v351 = vsub.s32 0, %v350
      %v352 = vrot.slane %v318, %v351
      %v353 = vlaneseq
      %v354 = vshrl.u32 %v353, 7
      %v355 = vsub.s32 0, %v354
      %v356 = vrot.slane %v319, %v355
      %v357 = vlaneseq
      %v358 = vshrl.u32 %v357, 7
      %v359 = vsub.s32 0, %v358
      %v360 = vrot.slane %v320, %v359
      %v361 = vlaneseq
      %v362 = vshrl.u32 %v361, 7
      %v363 = vsub.s32 0, %v362
      %v364 = vrot.slane %v321, %v363
      %v365 = vmul.f32 %v330, %v352
      %v366 = vmul.f32 %v331, %v356
      %v367 = vmul.f32 %v332, %v360
      %v368 = vmul.f32 %v333, %v364
      %v369 = vld [vmem:[%s5] sm:$0xff]
      %vm370 = vcmask 130048
      %v372 = vsel %vm370, %v369, 0
      %374 = vmatprep.subr.mxu0 %v341
      %375 = vmatpush1.msra.mxu0 %v340
      %376 = vmatprep.subr.mxu0 %v345
      %377 = vmatpush1.msra.mxu0 %v344
      %378 = vmatprep.subr.mxu0 0.0
      %379 = vmatpush1.msra.mxu0 0.0
      %380 = vmatprep.subr.mxu0 0.0
      %381 = vmatpush1.msra.mxu0 0.0
      %382 = vmatprep.subr.mxu0 0.0
      %383 = vmatpush1.msra.mxu0 0.0
      %384 = vmatprep.subr.mxu0 0.0
      %385 = vmatpush1.msra.mxu0 0.0
      %386 = vmatprep.subr.mxu0 0.0
      %387 = vmatpush1.msra.mxu0 0.0
      %388 = vmatprep.subr.mxu0 0.0
      %389 = vmatpush1.msra.mxu0 0.0
      %390 = vmatprep.subr.mxu0 0.0
      %391 = vmatpush1.msra.mxu0 0.0
      %392 = vmatprep.subr.mxu0 0.0
      %393 = vmatpush1.msra.mxu0 0.0
      %394 = vmatprep.subr.mxu0 0.0
      %395 = vmatpush1.msra.mxu0 0.0
      %396 = vmatprep.subr.mxu0 0.0
      %397 = vmatpush1.msra.mxu0 0.0
      %398 = vmatprep.subr.mxu0 0.0
      %399 = vmatpush1.msra.mxu0 0.0
      %400 = vmatprep.subr.mxu0 0.0
      %401 = vmatpush1.msra.mxu0 0.0
      %402 = vmatprep.subr.mxu0 0.0
      %403 = vmatpush1.msra.mxu0 0.0
      %404 = vmatprep.subr.mxu0 0.0
      %405 = vmatpush1.msra.mxu0 0.0
      %406 = vmatprep.subr.mxu0 0.0
      %407 = vmatpush1.msra.mxu0 0.0
      %408 = vmatprep.subr.mxu0 0.0
      %409 = vmatpush1.msra.mxu0 0.0
      %410 = vmatprep.subr.mxu0 0.0
      %411 = vmatpush1.msra.mxu0 0.0
      %412 = vmatprep.subr.mxu0 0.0
      %413 = vmatpush1.msra.mxu0 0.0
      %414 = vmatprep.subr.mxu0 0.0
      %415 = vmatpush1.msra.mxu0 0.0
      %416 = vmatprep.subr.mxu0 0.0
      %417 = vmatpush1.msra.mxu0 0.0
      %418 = vmatprep.subr.mxu0 0.0
      %419 = vmatpush1.msra.mxu0 0.0
      %420 = vmatprep.subr.mxu0 0.0
      %421 = vmatpush1.msra.mxu0 0.0
      %422 = vmatprep.subr.mxu0 0.0
      %423 = vmatpush1.msra.mxu0 0.0
      %424 = vmatprep.subr.mxu0 0.0
      %425 = vmatpush1.msra.mxu0 0.0
      %426 = vmatprep.subr.mxu0 0.0
      %427 = vmatpush1.msra.mxu0 0.0
      %428 = vmatprep.subr.mxu0 0.0
      %429 = vmatpush1.msra.mxu0 0.0
      %430 = vmatprep.subr.mxu0 0.0
      %431 = vmatpush1.msra.mxu0 0.0
      %432 = vmatprep.subr.mxu0 0.0
      %433 = vmatpush1.msra.mxu0 0.0
      %434 = vmatprep.subr.mxu0 0.0
      %435 = vmatpush1.msra.mxu0 0.0
      %436 = vmatprep.subr.mxu0 0.0
      %437 = vmatpush1.msra.mxu0 0.0
      %438 = vmatprep.mubr.f32.mxu0 0.0
      %439 = vmatmul.mubr.f32.gmra.mrb[0].mxu0 %v372
      %v440 = vpop.f32.mrb[0].mxu0
      %v441 = vadd.f32 0.0, %v440
      %v442 = vpop.f32.mrb[0].mxu0
      %v443 = vadd.f32 0.0, %v442
      %444 = vdwg.mxu0
      %445 = vmatprep.subr.mxu0 %v343
      %446 = vmatpush1.msra.mxu0 %v342
      %447 = vmatprep.subr.mxu0 %v347
      %448 = vmatpush1.msra.mxu0 %v346
      %449 = vmatprep.subr.mxu0 0.0
      %450 = vmatpush1.msra.mxu0 0.0
      %451 = vmatprep.subr.mxu0 0.0
      %452 = vmatpush1.msra.mxu0 0.0
      %453 = vmatprep.subr.mxu0 0.0
      %454 = vmatpush1.msra.mxu0 0.0
      %455 = vmatprep.subr.mxu0 0.0
      %456 = vmatpush1.msra.mxu0 0.0
      %457 = vmatprep.subr.mxu0 0.0
      %458 = vmatpush1.msra.mxu0 0.0
      %459 = vmatprep.subr.mxu0 0.0
      %460 = vmatpush1.msra.mxu0 0.0
      %461 = vmatprep.subr.mxu0 0.0
      %462 = vmatpush1.msra.mxu0 0.0
      %463 = vmatprep.subr.mxu0 0.0
      %464 = vmatpush1.msra.mxu0 0.0
      %465 = vmatprep.subr.mxu0 0.0
      %466 = vmatpush1.msra.mxu0 0.0
      %467 = vmatprep.subr.mxu0 0.0
      %468 = vmatpush1.msra.mxu0 0.0
      %469 = vmatprep.subr.mxu0 0.0
      %470 = vmatpush1.msra.mxu0 0.0
      %471 = vmatprep.subr.mxu0 0.0
      %472 = vmatpush1.msra.mxu0 0.0
      %473 = vmatprep.subr.mxu0 0.0
      %474 = vmatpush1.msra.mxu0 0.0
      %475 = vmatprep.subr.mxu0 0.0
      %476 = vmatpush1.msra.mxu0 0.0
      %477 = vmatprep.subr.mxu0 0.0
      %478 = vmatpush1.msra.mxu0 0.0
      %479 = vmatprep.subr.mxu0 0.0
      %480 = vmatpush1.msra.mxu0 0.0
      %481 = vmatprep.subr.mxu0 0.0
      %482 = vmatpush1.msra.mxu0 0.0
      %483 = vmatprep.subr.mxu0 0.0
      %484 = vmatpush1.msra.mxu0 0.0
      %485 = vmatprep.subr.mxu0 0.0
      %486 = vmatpush1.msra.mxu0 0.0
      %487 = vmatprep.subr.mxu0 0.0
      %488 = vmatpush1.msra.mxu0 0.0
      %489 = vmatprep.subr.mxu0 0.0
      %490 = vmatpush1.msra.mxu0 0.0
      %491 = vmatprep.subr.mxu0 0.0
      %492 = vmatpush1.msra.mxu0 0.0
      %493 = vmatprep.subr.mxu0 0.0
      %494 = vmatpush1.msra.mxu0 0.0
      %495 = vmatprep.subr.mxu0 0.0
      %496 = vmatpush1.msra.mxu0 0.0
      %497 = vmatprep.subr.mxu0 0.0
      %498 = vmatpush1.msra.mxu0 0.0
      %499 = vmatprep.subr.mxu0 0.0
      %500 = vmatpush1.msra.mxu0 0.0
      %501 = vmatprep.subr.mxu0 0.0
      %502 = vmatpush1.msra.mxu0 0.0
      %503 = vmatprep.subr.mxu0 0.0
      %504 = vmatpush1.msra.mxu0 0.0
      %505 = vmatprep.subr.mxu0 0.0
      %506 = vmatpush1.msra.mxu0 0.0
      %507 = vmatprep.subr.mxu0 0.0
      %508 = vmatpush1.msra.mxu0 0.0
      %509 = vmatprep.mubr.f32.mxu0 0.0
      %510 = vmatmul.mubr.f32.gmra.mrb[0].mxu0 %v372
      %v511 = vpop.f32.mrb[0].mxu0
      %v512 = vadd.f32 0.0, %v511
      %v513 = vpop.f32.mrb[0].mxu0
      %v514 = vadd.f32 0.0, %v513
      %515 = vdwg.mxu0
      %vm516 = vcmask 64512
      %v518 = vsel %vm516, %v348, 0
      %520 = vmatprep.subr.mxu0 %v366
      %521 = vmatpush1.msra.mxu0 %v365
      %522 = vmatprep.subr.mxu0 0.0
      %523 = vmatpush1.msra.mxu0 0.0
      %524 = vmatprep.subr.mxu0 0.0
      %525 = vmatpush1.msra.mxu0 0.0
      %526 = vmatprep.subr.mxu0 0.0
      %527 = vmatpush1.msra.mxu0 0.0
      %528 = vmatprep.subr.mxu0 0.0
      %529 = vmatpush1.msra.mxu0 0.0
      %530 = vmatprep.subr.mxu0 0.0
      %531 = vmatpush1.msra.mxu0 0.0
      %532 = vmatprep.subr.mxu0 0.0
      %533 = vmatpush1.msra.mxu0 0.0
      %534 = vmatprep.subr.mxu0 0.0
      %535 = vmatpush1.msra.mxu0 0.0
      %536 = vmatprep.subr.mxu0 0.0
      %537 = vmatpush1.msra.mxu0 0.0
      %538 = vmatprep.subr.mxu0 0.0
      %539 = vmatpush1.msra.mxu0 0.0
      %540 = vmatprep.subr.mxu0 0.0
      %541 = vmatpush1.msra.mxu0 0.0
      %542 = vmatprep.subr.mxu0 0.0
      %543 = vmatpush1.msra.mxu0 0.0
      %544 = vmatprep.subr.mxu0 0.0
      %545 = vmatpush1.msra.mxu0 0.0
      %546 = vmatprep.subr.mxu0 0.0
      %547 = vmatpush1.msra.mxu0 0.0
      %548 = vmatprep.subr.mxu0 0.0
      %549 = vmatpush1.msra.mxu0 0.0
      %550 = vmatprep.subr.mxu0 0.0
      %551 = vmatpush1.msra.mxu0 0.0
      %552 = vmatprep.subr.mxu0 0.0
      %553 = vmatpush1.msra.mxu0 0.0
      %554 = vmatprep.subr.mxu0 0.0
      %555 = vmatpush1.msra.mxu0 0.0
      %556 = vmatprep.subr.mxu0 0.0
      %557 = vmatpush1.msra.mxu0 0.0
      %558 = vmatprep.subr.mxu0 0.0
      %559 = vmatpush1.msra.mxu0 0.0
      %560 = vmatprep.subr.mxu0 0.0
      %561 = vmatpush1.msra.mxu0 0.0
      %562 = vmatprep.subr.mxu0 0.0
      %563 = vmatpush1.msra.mxu0 0.0
      %564 = vmatprep.subr.mxu0 0.0
      %565 = vmatpush1.msra.mxu0 0.0
      %566 = vmatprep.subr.mxu0 0.0
      %567 = vmatpush1.msra.mxu0 0.0
      %568 = vmatprep.subr.mxu0 0.0
      %569 = vmatpush1.msra.mxu0 0.0
      %570 = vmatprep.subr.mxu0 0.0
      %571 = vmatpush1.msra.mxu0 0.0
      %572 = vmatprep.subr.mxu0 0.0
      %573 = vmatpush1.msra.mxu0 0.0
      %574 = vmatprep.subr.mxu0 0.0
      %575 = vmatpush1.msra.mxu0 0.0
      %576 = vmatprep.subr.mxu0 0.0
      %577 = vmatpush1.msra.mxu0 0.0
      %578 = vmatprep.subr.mxu0 0.0
      %579 = vmatpush1.msra.mxu0 0.0
      %580 = vmatprep.subr.mxu0 0.0
      %581 = vmatpush1.msra.mxu0 0.0
      %582 = vmatprep.subr.mxu0 0.0
      %583 = vmatpush1.msra.mxu0 0.0
      %584 = vmatprep.mubr.f32.mxu0 0.0
      %585 = vmatmul.mubr.f32.gmra.mrb[0].mxu0 %v518
      %v586 = vpop.f32.mrb[0].mxu0
      %v587 = vadd.f32 %v441, %v586
      %v588 = vpop.f32.mrb[0].mxu0
      %v589 = vadd.f32 %v443, %v588
      %590 = vdwg.mxu0
      %591 = vmatprep.subr.mxu0 %v368
      %592 = vmatpush1.msra.mxu0 %v367
      %593 = vmatprep.subr.mxu0 0.0
      %594 = vmatpush1.msra.mxu0 0.0
      %595 = vmatprep.subr.mxu0 0.0
      %596 = vmatpush1.msra.mxu0 0.0
      %597 = vmatprep.subr.mxu0 0.0
      %598 = vmatpush1.msra.mxu0 0.0
      %599 = vmatprep.subr.mxu0 0.0
      %600 = vmatpush1.msra.mxu0 0.0
      %601 = vmatprep.subr.mxu0 0.0
      %602 = vmatpush1.msra.mxu0 0.0
      %603 = vmatprep.subr.mxu0 0.0
      %604 = vmatpush1.msra.mxu0 0.0
      %605 = vmatprep.subr.mxu0 0.0
      %606 = vmatpush1.msra.mxu0 0.0
      %607 = vmatprep.subr.mxu0 0.0
      %608 = vmatpush1.msra.mxu0 0.0
      %609 = vmatprep.subr.mxu0 0.0
      %610 = vmatpush1.msra.mxu0 0.0
      %611 = vmatprep.subr.mxu0 0.0
      %612 = vmatpush1.msra.mxu0 0.0
      %613 = vmatprep.subr.mxu0 0.0
      %614 = vmatpush1.msra.mxu0 0.0
      %615 = vmatprep.subr.mxu0 0.0
      %616 = vmatpush1.msra.mxu0 0.0
      %617 = vmatprep.subr.mxu0 0.0
      %618 = vmatpush1.msra.mxu0 0.0
      %619 = vmatprep.subr.mxu0 0.0
      %620 = vmatpush1.msra.mxu0 0.0
      %621 = vmatprep.subr.mxu0 0.0
      %622 = vmatpush1.msra.mxu0 0.0
      %623 = vmatprep.subr.mxu0 0.0
      %624 = vmatpush1.msra.mxu0 0.0
      %625 = vmatprep.subr.mxu0 0.0
      %626 = vmatpush1.msra.mxu0 0.0
      %627 = vmatprep.subr.mxu0 0.0
      %628 = vmatpush1.msra.mxu0 0.0
      %629 = vmatprep.subr.mxu0 0.0
      %630 = vmatpush1.msra.mxu0 0.0
      %631 = vmatprep.subr.mxu0 0.0
      %632 = vmatpush1.msra.mxu0 0.0
      %633 = vmatprep.subr.mxu0 0.0
      %634 = vmatpush1.msra.mxu0 0.0
      %635 = vmatprep.subr.mxu0 0.0
      %636 = vmatpush1.msra.mxu0 0.0
      %637 = vmatprep.subr.mxu0 0.0
      %638 = vmatpush1.msra.mxu0 0.0
      %639 = vmatprep.subr.mxu0 0.0
      %640 = vmatpush1.msra.mxu0 0.0
      %641 = vmatprep.subr.mxu0 0.0
      %642 = vmatpush1.msra.mxu0 0.0
      %643 = vmatprep.subr.mxu0 0.0
      %644 = vmatpush1.msra.mxu0 0.0
      %645 = vmatprep.subr.mxu0 0.0
      %646 = vmatpush1.msra.mxu0 0.0
      %647 = vmatprep.subr.mxu0 0.0
      %648 = vmatpush1.msra.mxu0 0.0
      %649 = vmatprep.subr.mxu0 0.0
      %650 = vmatpush1.msra.mxu0 0.0
      %651 = vmatprep.subr.mxu0 0.0
      %652 = vmatpush1.msra.mxu0 0.0
      %653 = vmatprep.subr.mxu0 0.0
      %654 = vmatpush1.msra.mxu0 0.0
      %655 = vmatprep.mubr.f32.mxu0 0.0
      %656 = vmatmul.mubr.f32.gmra.mrb[0].mxu0 %v518
      %v657 = vpop.f32.mrb[0].mxu0
      %v658 = vadd.f32 %v512, %v657
      %v659 = vpop.f32.mrb[0].mxu0
      %v660 = vadd.f32 %v514, %v659
      %661 = vdwg.mxu0
      %v662 = vadd.f32 %v587, %v314
      %v663 = vadd.f32 %v589, %v315
      %v664 = vadd.f32 %v658, %v316
      %v665 = vadd.f32 %v660, %v317
      %v666 = vtanh.pop %v662
      %v667 = vtanh.pop %v663
      %v668 = vtanh.pop %v664
      %v669 = vtanh.pop %v665
      %v670 = vlaneseq
      %v671 = vshrl.u32 %v670, 7
      %v672 = vsub.s32 1, %v671
      %v673 = vrot.slane %v318, %v672
      %v674 = vlaneseq
      %v675 = vshrl.u32 %v674, 7
      %v676 = vsub.s32 1, %v675
      %v677 = vrot.slane %v319, %v676
      %v678 = vlaneseq
      %v679 = vshrl.u32 %v678, 7
      %v680 = vsub.s32 1, %v679
      %v681 = vrot.slane %v320, %v680
      %v682 = vlaneseq
      %v683 = vshrl.u32 %v682, 7
      %v684 = vsub.s32 1, %v683
      %v685 = vrot.slane %v321, %v684
      %v686 = vmul.f32 %v673, %v330
      %v687 = vmul.f32 %v677, %v331
      %v688 = vmul.f32 %v681, %v332
      %v689 = vmul.f32 %v685, %v333
      %v690 = vsub.f32 %v322, %v686
      %v691 = vsub.f32 %v323, %v687
      %v692 = vsub.f32 %v324, %v688
      %v693 = vsub.f32 %v325, %v689
      %v694 = vlaneseq
      %v695 = vshrl.u32 %v694, 7
      %v696 = vsub.s32 3, %v695
      %v697 = vrot.slane %v318, %v696
      %v698 = vlaneseq
      %v699 = vshrl.u32 %v698, 7
      %v700 = vsub.s32 3, %v699
      %v701 = vrot.slane %v319, %v700
      %v702 = vlaneseq
      %v703 = vshrl.u32 %v702, 7
      %v704 = vsub.s32 3, %v703
      %v705 = vrot.slane %v320, %v704
      %v706 = vlaneseq
      %v707 = vshrl.u32 %v706, 7
      %v708 = vsub.s32 3, %v707
      %v709 = vrot.slane %v321, %v708
      %v710 = vmul.f32 %v690, %v697
      %v711 = vmul.f32 %v691, %v701
      %v712 = vmul.f32 %v692, %v705
      %v713 = vmul.f32 %v693, %v709
      %v714 = vsub.f32 %v666, %v710
      %v715 = vsub.f32 %v667, %v711
      %v716 = vsub.f32 %v668, %v712
      %v717 = vsub.f32 %v669, %v713
      %v718 = vld [vmem:[%s6] sm:$0xf]
      %v719 = vmul.f32 %v714, %v714
      %v720 = vmul.f32 %v715, %v715
      %v721 = vmul.f32 %v716, %v716
      %v722 = vmul.f32 %v717, %v717
      %v723 = vrot.slane %v719, 4
      %v724 = vadd.f32 %v719, %v723
      %v725 = vrot.slane %v724, 2
      %v726 = vadd.f32 %v724, %v725
      %v727 = vrot.slane %v726, 1
      %v728 = vadd.f32 %v726, %v727
      %v729 = vrot.slane %v720, 4
      %v730 = vadd.f32 %v720, %v729
      %v731 = vrot.slane %v730, 2
      %v732 = vadd.f32 %v730, %v731
      %v733 = vrot.slane %v732, 1
      %v734 = vadd.f32 %v732, %v733
      %v735 = vrot.slane %v721, 4
      %v736 = vadd.f32 %v721, %v735
      %v737 = vrot.slane %v736, 2
      %v738 = vadd.f32 %v736, %v737
      %v739 = vrot.slane %v738, 1
      %v740 = vadd.f32 %v738, %v739
      %v741 = vrot.slane %v722, 4
      %v742 = vadd.f32 %v722, %v741
      %v743 = vrot.slane %v742, 2
      %v744 = vadd.f32 %v742, %v743
      %v745 = vrot.slane %v744, 1
      %v746 = vadd.f32 %v744, %v745
      %v747 = vmul.f32 %v728, %v318
      %v748 = vmul.f32 %v734, %v319
      %v749 = vmul.f32 %v740, %v320
      %v750 = vmul.f32 %v746, %v321
      %v755 = vcombine.high %v747, %v748
      %v756 = vcombine.high %v749, %v750
      %v758 = vunpack.c.l.s4 1966171168
      %v759 = vunpack.c.0.s8 %v758
      %v760 = vlaneseq
      %v761 = vshrl.u32 %v760, 7
      %v762 = vsub.s32 %v759, %v761
      %v763 = vrot.slane %v755, %v762
      %v765 = vunpack.c.l.s4 1966171168
      %v766 = vunpack.c.0.s8 %v765
      %v767 = vlaneseq
      %v768 = vshrl.u32 %v767, 7
      %v769 = vsub.s32 %v766, %v768
      %v770 = vrot.slane %v756, %v769
      %v771 = vcombine.low %v763, %v770
      %v773 = vunpack.c.l.s4 1966171168
      %v774 = vunpack.c.0.s8 %v773
      %v775 = vlaneseq
      %v776 = vshrl.u32 %v775, 7
      %v777 = vsub.s32 %v774, %v776
      %v778 = vrot.slane %v771, %v777
      %v780 = vadd.f32 %v718, %v778
      %v781 = vlaneseq
      %vm782 = vcmp.ge.s32.totalorder %v781, 0
      %vm783 = vcmp.lt.s32.totalorder %v781, 512
      %vm784 = vmand %vm782, %vm783
      %785 = vst.msk [vmem:[%s6] sm:$0xf] %vm784, %v780
      %v786 = vlaneseq
      %v787 = vshrl.u32 %v786, 7
      %v788 = vsub.s32 2, %v787
      %v789 = vrot.slane %v318, %v788
      %v790 = vlaneseq
      %v791 = vshrl.u32 %v790, 7
      %v792 = vsub.s32 2, %v791
      %v793 = vrot.slane %v319, %v792
      %v794 = vlaneseq
      %v795 = vshrl.u32 %v794, 7
      %v796 = vsub.s32 2, %v795
      %v797 = vrot.slane %v320, %v796
      %v798 = vlaneseq
      %v799 = vshrl.u32 %v798, 7
      %v800 = vsub.s32 2, %v799
      %v801 = vrot.slane %v321, %v800
      %v802 = vmul.f32 %v789, %v666
      %v803 = vmul.f32 %v793, %v667
      %v804 = vmul.f32 %v797, %v668
      %v805 = vmul.f32 %v801, %v669
      %v806 = vadd.f32 %v686, %v802
      %v807 = vadd.f32 %v687, %v803
      %v808 = vadd.f32 %v688, %v804
      %v809 = vadd.f32 %v689, %v805
      %v810 = vmax.f32 %v806, -1.0
      %v811 = vmax.f32 %v807, -1.0
      %v812 = vmax.f32 %v808, -1.0
      %v813 = vmax.f32 %v809, -1.0
      %v814 = vmin.f32 %v810, 1.0
      %v815 = vmin.f32 %v811, 1.0
      %v816 = vmin.f32 %v812, 1.0
      %v817 = vmin.f32 %v813, 1.0
      %v818 = vadd.f32 %v814, 1.0
      %v819 = vadd.f32 %v815, 1.0
      %v820 = vadd.f32 %v816, 1.0
      %v821 = vadd.f32 %v817, 1.0
      %v822 = vmul.f32 %v818, 127.5
      %v823 = vmul.f32 %v819, 127.5
      %v824 = vmul.f32 %v820, 127.5
      %v825 = vmul.f32 %v821, 127.5
      %v826 = vfloor.f32 %v822
      %v827 = vfloor.f32 %v823
      %v828 = vfloor.f32 %v824
      %v829 = vfloor.f32 %v825
      %v830 = vmul.f32 %v826, 0.007843138
      %v831 = vmul.f32 %v827, 0.007843138
      %v832 = vmul.f32 %v828, 0.007843138
      %v833 = vmul.f32 %v829, 0.007843138
      %v834 = vsub.f32 %v830, 1.0
      %v835 = vsub.f32 %v831, 1.0
      %v836 = vsub.f32 %v832, 1.0
      %v837 = vsub.f32 %v833, 1.0
      %s838 = sadd.s32 %s17, 2
      %s839 = smul.u32 %s838, 8
      %s840 = sshra.s32 %s839, 3
      %s841 = sand.u32 %s839, 7
      %s842 = smul.u32 %s840, 4
      %s843 = smul.addr %s842, 8
      %s844 = scalar_lea.vmem [#allocation2], %s843
      %845 = vst [vmem:[%s844] sm:$0xff] %v834
      %846 = vst [vmem:[%s844 + $0x8] sm:$0xff] %v835
      %847 = vst [vmem:[%s844 + $0x10] sm:$0xff] %v836
      %848 = vst [vmem:[%s844 + $0x18] sm:$0xff] %v837
      // Predicated region
      $region49: #{denoiser_forward.1} parent=43 // pred_check
        %p849 = pneg %p173
      $region50: #{denoiser_forward.1} parent=43 // pred_check_branch
        %851 = sbr.rel (%p849) target = $region52
      $region51: #{denoiser_forward.1} parent=43 // pred_region
        _
      $region52: #{denoiser_forward.1} parent=43 // pred_fallthru
        _
      // Predicated region
      $region53: #{denoiser_forward.1} parent=43 // pred_check
        %p852 = pneg %p173
      $region54: #{denoiser_forward.1} parent=43 // pred_check_branch
        %854 = sbr.rel (%p852) target = $region56
      $region55: #{denoiser_forward.1} parent=43 // pred_region
        _
      $region56: #{denoiser_forward.1} parent=43 // pred_fallthru
        _
    $region44: #{denoiser_forward.1} parent=5 // pred_fallthru
      _
    %p855 = scmp.le.s32.totalorder 2, %s12
    // Predicated region
    $region57: #{denoiser_forward.1} parent=5 // pred_check
      %p856 = pneg %p855
    $region58: #{denoiser_forward.1} parent=5 // pred_check_branch
      %858 = sbr.rel (%p856) target = $region60
    $region59: #{denoiser_forward.1} parent=5 // pred_region
      %s859 = ssub.s32 %s12, 2
    $region60: #{denoiser_forward.1} parent=5 // pred_fallthru
      _
  $region6: #{denoiser_forward.1} parent=0 // loop_footer
    %s16 = sadd.s32 1, %s12
  $region7: #{denoiser_forward.1} parent=0 // loop_footer_branch
    %11 = sbr.rel target = $region3
  $region8: #{denoiser_forward.1} parent=0 // loop_exit
    _

</llo_original>
